<compile_context>
chip_gen: v7x
topology: tpu7x:2x2x1
jax: 0.10.0
libtpu: 0.0.40
codegen_flags: <defaults>
</compile_context>

<pallas_src>
import functools

import jax
import jax.numpy as jnp
from jax.experimental import pallas as pl
from jax.experimental.pallas import tpu as pltpu


def _round_up(x, m):
    return -(-int(x) // int(m)) * int(m)


def _lora_linear_kernel(seed_ref, x_ref, w_ref, *rest, has_bias, has_lora,
                        scale, dropout_p, training):
    """Grid = (M//tm, N//tn, K//tk); K is the (arbitrary) reduction axis.

    Ref order: seed | x, W, [bias], [Wd, Wu] | out | acc, [down]."""
    rest = list(rest)
    b_ref = rest.pop(0) if has_bias else None
    if has_lora:
        wd_ref = rest.pop(0)
        wu_ref = rest.pop(0)
    o_ref = rest.pop(0)
    acc_ref = rest.pop(0)
    down_ref = rest.pop(0) if has_lora else None

    k = pl.program_id(2)

    @pl.when(k == 0)
    def _init():
        acc_ref[...] = jnp.zeros_like(acc_ref)
        if has_lora:
            down_ref[...] = jnp.zeros_like(down_ref)

    x = x_ref[...]                                                     # (tm, tk) bf16
    # Main GEMM: accumulate x_tile @ W_tile into the f32 scratch.
    acc_ref[...] += jnp.dot(x, w_ref[...], preferred_element_type=jnp.float32)
    if has_lora:
        # LoRA down projection: tiny (tm, r_pad) accumulator, also tiled over K.
        down_ref[...] += jnp.dot(x, wd_ref[...],
                                 preferred_element_type=jnp.float32)

    @pl.when(k == pl.num_programs(2) - 1)
    def _finalize():
        out = acc_ref[...]
        if has_bias:
            out = out + b_ref[...]                                     # (1, tn) bcast
        if has_lora:
            # Rank-r up projection done ONCE per output tile (K = r_pad, one MXU pass).
            up = jnp.dot(down_ref[...].astype(wu_ref.dtype), wu_ref[...],
                         preferred_element_type=jnp.float32)           # (tm, tn)
            if training and dropout_p > 0.0:
                # Inverted dropout via the on-chip PRNG; per-tile seed so tiles get
                # independent masks.  Integer threshold compare, scale/(1-p) folded.
                tile_id = (pl.program_id(0) * pl.num_programs(1)
                           + pl.program_id(1))
                pltpu.prng_seed(seed_ref[0] + tile_id)
                bits = pltpu.bitcast(pltpu.prng_random_bits(up.shape), jnp.uint32)
                thresh = jnp.uint32(min(int(round(dropout_p * (1 << 32))),
                                        (1 << 32) - 1))
                keep = bits >= thresh                                  # P(keep)=1-p
                out = out + jnp.where(keep,
                                      up * (scale / (1.0 - dropout_p)),
                                      jnp.float32(0.0))
            else:
                out = out + up * scale
        o_ref[...] = out.astype(o_ref.dtype)


def prepare_lora_linear(w, b, w_down, w_up, *, scale=1.0,
                        compute_dtype=jnp.bfloat16, merge_lora=False,
                        tm_max=512, tn_max=512, tk_max=512):
    """One-time parameter prep (do NOT call per forward):
    transpose to row-major (in, out) layouts, cast to the MXU compute dtype,
    pad K/N (and the LoRA rank) to lane-dense multiples of 128, optionally fold
    the LoRA update into the base weight for inference (merge_lora=True)."""
    w = jnp.asarray(w)
    w_down = jnp.asarray(w_down)
    w_up = jnp.asarray(w_up)
    out_features, in_features = w.shape
    r = int(w_down.shape[0])
    r_pad = _round_up(r, 128)                       # lane-dense LoRA intermediate

    tk = min(tk_max, _round_up(in_features, 128))
    tn = min(tn_max, _round_up(out_features, 128))
    K_pad = _round_up(in_features, tk)
    N_pad = _round_up(out_features, tn)

    def pad2(a, rows, cols):
        return jnp.pad(a, ((0, rows - a.shape[0]), (0, cols - a.shape[1])))

    if merge_lora:
        # Inference fast path: W' = W + scale * Wu @ Wd, merged once (f32), then cast.
        w_eff = (w.astype(jnp.float32)
                 + float(scale) * (w_up.astype(jnp.float32)
                                   @ w_down.astype(jnp.float32)))
        wt = pad2(w_eff.T.astype(compute_dtype), K_pad, N_pad)        # (K_pad, N_pad)
        wdt = None
        wut = None
    else:
        wt = pad2(w.T.astype(compute_dtype), K_pad, N_pad)            # (K_pad, N_pad)
        wdt = pad2(w_down.T.astype(compute_dtype), K_pad, r_pad)      # (K_pad, r_pad)
        wut = pad2(w_up.T.astype(compute_dtype), r_pad, N_pad)        # (r_pad, N_pad)

    if b is not None:
        bias = jnp.pad(jnp.asarray(b, jnp.float32).reshape(1, -1),
                       ((0, 0), (0, N_pad - out_features)))           # (1, N_pad)
    else:
        bias = None

    return dict(in_features=in_features, out_features=out_features,
                r=r, r_pad=r_pad,
                scale=float(scale), compute_dtype=compute_dtype,
                K_pad=K_pad, N_pad=N_pad, tk=tk, tn=tn, tm_max=tm_max,
                wt=wt, wdt=wdt, wut=wut, bias=bias,
                has_lora=not merge_lora, has_bias=b is not None)


def lora_injected_linear(params, x, *, training=False, dropout_p=0.1, seed=0):
    """x: (..., in_features)  ->  (..., out_features), matching nn.Linear layout."""
    if training and dropout_p > 0.0 and not params["has_lora"]:
        raise ValueError("merge_lora=True params are inference-only; "
                         "prepare with merge_lora=False for training.")

    in_features = params["in_features"]
    out_features = params["out_features"]
    r_pad = params["r_pad"]
    K_pad, N_pad = params["K_pad"], params["N_pad"]
    tk, tn = params["tk"], params["tn"]
    has_bias, has_lora = params["has_bias"], params["has_lora"]

    orig_shape = x.shape
    out_dtype = x.dtype
    x2 = x.reshape(-1, in_features)
    M = x2.shape[0]
    tm = min(params["tm_max"], _round_up(M, 8))
    M_pad = _round_up(M, tm)

    xk = x2.astype(params["compute_dtype"])
    if (M_pad, K_pad) != (M, in_features):
        xk = jnp.pad(xk, ((0, M_pad - M), (0, K_pad - in_features)))

    grid = (M_pad // tm, N_pad // tn, K_pad // tk)

    # Inputs + specs (index_maps get the trailing scalar-prefetch ref -> use *_).
    in_specs = [
        pl.BlockSpec((tm, tk), lambda i, j, k, *_: (i, k)),            # x tile
        pl.BlockSpec((tk, tn), lambda i, j, k, *_: (k, j)),            # W (in, out)
    ]
    inputs = [xk, params["wt"]]
    if has_bias:
        in_specs.append(pl.BlockSpec((1, tn), lambda i, j, k, *_: (0, j)))
        inputs.append(params["bias"])
    if has_lora:
        in_specs.append(pl.BlockSpec((tk, r_pad), lambda i, j, k, *_: (k, 0)))   # Wd
        in_specs.append(pl.BlockSpec((r_pad, tn), lambda i, j, k, *_: (0, j)))   # Wu
        inputs += [params["wdt"], params["wut"]]

    scratch = [pltpu.VMEM((tm, tn), jnp.float32)]                      # main acc
    if has_lora:
        scratch.append(pltpu.VMEM((tm, r_pad), jnp.float32))           # down acc

    kernel = functools.partial(
        _lora_linear_kernel, has_bias=has_bias, has_lora=has_lora,
        scale=params["scale"], dropout_p=float(dropout_p),
        training=bool(training))

    seed_arr = jnp.asarray([seed], jnp.int32)

    out = pl.pallas_call(
        kernel,
        out_shape=jax.ShapeDtypeStruct((M_pad, N_pad), out_dtype),
        grid_spec=pltpu.PrefetchScalarGridSpec(
            num_scalar_prefetch=1,                 # dropout seed lives in SMEM
            grid=grid,
            in_specs=in_specs,
            out_specs=pl.BlockSpec((tm, tn), lambda i, j, k, *_: (i, j)),
            scratch_shapes=scratch),
        compiler_params=pltpu.CompilerParams(
            # M/N parallel (megacore sharding), K reduction last.
            dimension_semantics=("parallel", "parallel", "arbitrary"),
            # Tiles use only a few MiB double-buffered; 48 MiB keeps headroom even
            # on v7x's 64 MiB physical VMEM while allowing larger tiles on
            # v5e/v6e (128 MiB physical).
            vmem_limit_bytes=48 * 1024 * 1024),
    )(seed_arr, *inputs)

    out = out[:M, :out_features]
    return out.reshape(*orig_shape[:-1], out_features)


if __name__ == "__main__":
    # Module hyper-params (bias=False is the PyTorch default here).
    in_features, out_features, r = 32, 64, 4
    scale, dropout_p = 1.0, 0.1
    batch, seq = 2, 8

    key = jax.random.PRNGKey(0)
    kx, kw, kd, ku, kb = jax.random.split(key, 5)

    x = jax.random.normal(kx, (batch, seq, in_features), jnp.float32)
    w = jax.random.normal(kw, (out_features, in_features), jnp.float32) * (
        1.0 / jnp.sqrt(in_features))
    b = None                                         # module default: bias=False
    w_down = jax.random.normal(kd, (r, in_features), jnp.float32) * (1.0 / r)
    # NOTE: the module zero-inits lora_up; use nonzero values here so the LoRA
    # path is actually exercised numerically.
    w_up = jax.random.normal(ku, (out_features, r), jnp.float32) * 0.1

    # Reference computed with the same bf16 input rounding the kernel uses.
    xb = x.astype(jnp.bfloat16).astype(jnp.float32)
    wb = w.astype(jnp.bfloat16).astype(jnp.float32)
    wdb = w_down.astype(jnp.bfloat16).astype(jnp.float32)
    wub = w_up.astype(jnp.bfloat16).astype(jnp.float32)
    ref = xb @ wb.T + ((xb @ wdb.T) @ wub.T) * scale

    # --- Path 1: full LoRA kernel (training-capable structure), eval forward.
    params = prepare_lora_linear(w, b, w_down, w_up, scale=scale,
                                 compute_dtype=jnp.bfloat16)
    out = lora_injected_linear(params, x, training=False, dropout_p=dropout_p)
    out = jax.block_until_ready(out)
    assert out.shape == (batch, seq, out_features)
    assert jnp.allclose(out, ref, atol=5e-2, rtol=5e-2), "LoRA path mismatch"

    # --- Path 2: merged-weight inference fast path (single matmul + bias).
    b2 = jax.random.normal(kb, (out_features,), jnp.float32) * 0.1
    params_m = prepare_lora_linear(w, b2, w_down, w_up, scale=scale,
                                   compute_dtype=jnp.bfloat16, merge_lora=True)
    out_m = jax.block_until_ready(
        lora_injected_linear(params_m, x, training=False))
    ref_m = ref + b2[None, None, :]
    assert out_m.shape == (batch, seq, out_features)
    assert jnp.allclose(out_m, ref_m, atol=5e-2, rtol=5e-2), "merged path mismatch"

    # TODO(synk): training-mode dropout uses the TPU hardware PRNG (per-tile seeded,
    # not torch's RNG stream), so it matches torch only in distribution, not bitwise;
    # it is exercised only when training=True on real hardware.
    print("KERNEL_OK")
</pallas_src>

<mosaic_0001>
module attributes {stable_mosaic.version = 11 : i64} {
  func.func @_lora_linear_kernel(%arg0: i32, %arg1: i32, %arg2: i32, %arg3: memref<1xi32, #tpu.memory_space<smem>>, %arg4: memref<16x128xbf16, #tpu.memory_space<vmem>>, %arg5: memref<128x128xbf16, #tpu.memory_space<vmem>>, %arg6: memref<128x128xbf16, #tpu.memory_space<vmem>>, %arg7: memref<128x128xbf16, #tpu.memory_space<vmem>>, %arg8: memref<16x128xf32, #tpu.memory_space<vmem>>, %arg9: memref<16x128xf32, #tpu.memory_space<vmem>>, %arg10: memref<16x128xf32, #tpu.memory_space<vmem>>) attributes {dimension_semantics = [#tpu.dimension_semantics<parallel>, #tpu.dimension_semantics<parallel>, #tpu.dimension_semantics<arbitrary>], iteration_bounds = array<i64: 1, 1, 1>, scalar_prefetch = 1 : i64, scratch_operands = 2 : i64, tpu.core_type = #tpu.core_type<tc>, window_params = [{transform_indices = @transform_0, window_bounds = array<i64: 16, 128>}, {transform_indices = @transform_1, window_bounds = array<i64: 128, 128>}, {transform_indices = @transform_2, window_bounds = array<i64: 128, 128>}, {transform_indices = @transform_3, window_bounds = array<i64: 128, 128>}, {transform_indices = @transform_4, window_bounds = array<i64: 16, 128>}]} {
    %c0_i32 = arith.constant 0 : i32
    %0 = arith.cmpi eq, %arg2, %c0_i32 : i32
    %1 = arith.extui %0 : i1 to i32
    %c0_i32_0 = arith.constant 0 : i32
    %2 = arith.cmpi ne, %1, %c0_i32_0 : i32
    scf.if %2 {
      %cst_17 = arith.constant 0.000000e+00 : f32
      %17 = vector.broadcast %cst_17 : f32 to vector<16x128xf32>
      %c0_18 = arith.constant 0 : index
      %c0_19 = arith.constant 0 : index
      %18 = vector.load %arg9[%c0_18, %c0_19] : memref<16x128xf32, #tpu.memory_space<vmem>>, vector<16x128xf32>
      tpu.vector_store %arg9[%c0_18, %c0_19], %17 {strides = array<i32>} : memref<16x128xf32, #tpu.memory_space<vmem>>, vector<16x128xf32>,
      %cst_20 = arith.constant 0.000000e+00 : f32
      %19 = vector.broadcast %cst_20 : f32 to vector<16x128xf32>
      %c0_21 = arith.constant 0 : index
      %c0_22 = arith.constant 0 : index
      %20 = vector.load %arg10[%c0_21, %c0_22] : memref<16x128xf32, #tpu.memory_space<vmem>>, vector<16x128xf32>
      tpu.vector_store %arg10[%c0_21, %c0_22], %19 {strides = array<i32>} : memref<16x128xf32, #tpu.memory_space<vmem>>, vector<16x128xf32>,
    } else {
    }
    %c0 = arith.constant 0 : index
    %c0_1 = arith.constant 0 : index
    %3 = vector.load %arg4[%c0, %c0_1] : memref<16x128xbf16, #tpu.memory_space<vmem>>, vector<16x128xbf16>
    %c0_2 = arith.constant 0 : index
    %c0_3 = arith.constant 0 : index
    %4 = vector.load %arg9[%c0_2, %c0_3] : memref<16x128xf32, #tpu.memory_space<vmem>>, vector<16x128xf32>
    %c0_4 = arith.constant 0 : index
    %c0_5 = arith.constant 0 : index
    %5 = vector.load %arg5[%c0_4, %c0_5] : memref<128x128xbf16, #tpu.memory_space<vmem>>, vector<128x128xbf16>
    %cst = arith.constant dense<0.000000e+00> : vector<16x128xf32>
    %6 = tpu.matmul %3, %5, %cst {dimension_numbers = #tpu.dot_dimension_numbers<[1], [0], [0], [1], [0, 0, 1, 1], [], []>} : vector<16x128xbf16>, vector<128x128xbf16>, vector<16x128xf32> -> vector<16x128xf32>
    %7 = arith.addf %4, %6 : vector<16x128xf32>
    %c0_6 = arith.constant 0 : index
    %c0_7 = arith.constant 0 : index
    %8 = vector.load %arg9[%c0_6, %c0_7] : memref<16x128xf32, #tpu.memory_space<vmem>>, vector<16x128xf32>
    tpu.vector_store %arg9[%c0_6, %c0_7], %7 {strides = array<i32>} : memref<16x128xf32, #tpu.memory_space<vmem>>, vector<16x128xf32>,
    %c0_8 = arith.constant 0 : index
    %c0_9 = arith.constant 0 : index
    %9 = vector.load %arg10[%c0_8, %c0_9] : memref<16x128xf32, #tpu.memory_space<vmem>>, vector<16x128xf32>
    %c0_10 = arith.constant 0 : index
    %c0_11 = arith.constant 0 : index
    %10 = vector.load %arg6[%c0_10, %c0_11] : memref<128x128xbf16, #tpu.memory_space<vmem>>, vector<128x128xbf16>
    %cst_12 = arith.constant dense<0.000000e+00> : vector<16x128xf32>
    %11 = tpu.matmul %3, %10, %cst_12 {dimension_numbers = #tpu.dot_dimension_numbers<[1], [0], [0], [1], [0, 0, 1, 1], [], []>} : vector<16x128xbf16>, vector<128x128xbf16>, vector<16x128xf32> -> vector<16x128xf32>
    %12 = arith.addf %9, %11 : vector<16x128xf32>
    %c0_13 = arith.constant 0 : index
    %c0_14 = arith.constant 0 : index
    %13 = vector.load %arg10[%c0_13, %c0_14] : memref<16x128xf32, #tpu.memory_space<vmem>>, vector<16x128xf32>
    tpu.vector_store %arg10[%c0_13, %c0_14], %12 {strides = array<i32>} : memref<16x128xf32, #tpu.memory_space<vmem>>, vector<16x128xf32>,
    %c0_i32_15 = arith.constant 0 : i32
    %14 = arith.cmpi eq, %arg2, %c0_i32_15 : i32
    %15 = arith.extui %14 : i1 to i32
    %c0_i32_16 = arith.constant 0 : i32
    %16 = arith.cmpi ne, %15, %c0_i32_16 : i32
    scf.if %16 {
      %c0_17 = arith.constant 0 : index
      %c0_18 = arith.constant 0 : index
      %17 = vector.load %arg9[%c0_17, %c0_18] : memref<16x128xf32, #tpu.memory_space<vmem>>, vector<16x128xf32>
      %c0_19 = arith.constant 0 : index
      %c0_20 = arith.constant 0 : index
      %18 = vector.load %arg10[%c0_19, %c0_20] : memref<16x128xf32, #tpu.memory_space<vmem>>, vector<16x128xf32>
      %19 = arith.truncf %18 : vector<16x128xf32> to vector<16x128xbf16>
      %c0_21 = arith.constant 0 : index
      %c0_22 = arith.constant 0 : index
      %20 = vector.load %arg7[%c0_21, %c0_22] : memref<128x128xbf16, #tpu.memory_space<vmem>>, vector<128x128xbf16>
      %cst_23 = arith.constant dense<0.000000e+00> : vector<16x128xf32>
      %21 = tpu.matmul %19, %20, %cst_23 {dimension_numbers = #tpu.dot_dimension_numbers<[1], [0], [0], [1], [0, 0, 1, 1], [], []>} : vector<16x128xbf16>, vector<128x128xbf16>, vector<16x128xf32> -> vector<16x128xf32>
      %cst_24 = arith.constant 1.000000e+00 : f32
      %22 = vector.broadcast %cst_24 : f32 to vector<16x128xf32>
      %23 = arith.mulf %21, %22 : vector<16x128xf32>
      %24 = arith.addf %17, %23 : vector<16x128xf32>
      %c0_25 = arith.constant 0 : index
      %c0_26 = arith.constant 0 : index
      %25 = vector.load %arg8[%c0_25, %c0_26] : memref<16x128xf32, #tpu.memory_space<vmem>>, vector<16x128xf32>
      tpu.vector_store %arg8[%c0_25, %c0_26], %24 {strides = array<i32>} : memref<16x128xf32, #tpu.memory_space<vmem>>, vector<16x128xf32>,
    } else {
    }
    return
  }
  func.func @transform_0(%arg0: i32, %arg1: i32, %arg2: i32, %arg3: memref<1xi32, #tpu.memory_space<smem>>) -> (i32, i32) {
    %c0_i32 = arith.constant 0 : i32
    return %arg0, %arg2 : i32, i32
  }
  func.func @transform_1(%arg0: i32, %arg1: i32, %arg2: i32, %arg3: memref<1xi32, #tpu.memory_space<smem>>) -> (i32, i32) {
    %c0_i32 = arith.constant 0 : i32
    return %arg2, %arg1 : i32, i32
  }
  func.func @transform_2(%arg0: i32, %arg1: i32, %arg2: i32, %arg3: memref<1xi32, #tpu.memory_space<smem>>) -> (i32, i32) {
    %c0_i32 = arith.constant 0 : i32
    %c0_i32_0 = arith.constant 0 : i32
    return %arg2, %c0_i32 : i32, i32
  }
  func.func @transform_3(%arg0: i32, %arg1: i32, %arg2: i32, %arg3: memref<1xi32, #tpu.memory_space<smem>>) -> (i32, i32) {
    %c0_i32 = arith.constant 0 : i32
    %c0_i32_0 = arith.constant 0 : i32
    return %c0_i32, %arg1 : i32, i32
  }
  func.func @transform_4(%arg0: i32, %arg1: i32, %arg2: i32, %arg3: memref<1xi32, #tpu.memory_space<smem>>) -> (i32, i32) {
    %c0_i32 = arith.constant 0 : i32
    return %arg0, %arg1 : i32, i32
  }
}

</mosaic_0001>

<llo_original>
// kernel: tpu_custom_call.1
$region0: #{tpu_custom_call.1}
  #allocation0 [shape = 'u32[]', space=smem, size = 0x4, offset = 0x4, fixed_abs, tag = 'smem constant byte address 0x4 - core index']
  #allocation1 [shape = 'u32[144,128]{1,0:T(1,128)}', space=vmem, size = 0x12000, scoped, tag = 'internal scratch']
  #allocation2 [shape = 'f32[16,128]{1,0:T(8,128)}', space=vmem, size = 0x2000, scoped, tag = 'scratch operand']
  #allocation3 [shape = 'f32[16,128]{1,0:T(8,128)}', space=vmem, size = 0x2000, scoped, tag = 'scratch operand']
  #allocation4 [shape = 's32[1]{0}', space=sflag, size = 0x4, scoped, tag = 'scoped memory for tpu_custom_call.1']
  #allocation5 [shape = 's32[1]{0:T(128)S(6)}', space=smem, size = 0x200, scoped, tag = 'prefetched SMEM operand 0']
  %s0 = inlined_call_operand.<no memory space> [shape: s32[1], index: 0, kind: input, shape index: {}]
  %s1 = inlined_call_operand.hbm [shape: bf16[16,128], index: 1, kind: input, shape index: {}]
  %s2 = inlined_call_operand.hbm [shape: bf16[128,128], index: 2, kind: input, shape index: {}]
  %s3 = inlined_call_operand.hbm [shape: bf16[128,128], index: 3, kind: input, shape index: {}]
  %s4 = inlined_call_operand.hbm [shape: bf16[128,128], index: 4, kind: input, shape index: {}]
  %s5 = inlined_call_operand.hbm [shape: f32[16,128], index: 5, kind: output, shape index: {}]
  %s6 = sld [smem:[#allocation0]]
  $region50: #{tpu_custom_call.1} parent=0
    _
  %s8 = ssub.s32 1, %s6
  %s9 = scalar_select 0, %s8, %s6
  %10 = sst [smem:[#allocation5]] %s0
  $region1: #{tpu_custom_call.1} parent=0
    #allocation6 [shape = 'u8[4096]{0}', space=vmem, size = 0x1000, scoped, tag = 'input window, operand 1, single buffered']
    #allocation7 [shape = 's32[1]{0}', space=sflag, size = 0x4, scoped, tag = 'scoped memory for tpu_custom_call.1']
    #allocation8 [shape = 's32[1]{0}', space=sflag, size = 0x4, scoped, tag = 'scoped memory for tpu_custom_call.1']
    #allocation9 [shape = 'u8[32768]{0}', space=vmem, size = 0x8000, scoped, tag = 'input window, operand 2, single buffered']
    #allocation10 [shape = 's32[1]{0}', space=sflag, size = 0x4, scoped, tag = 'scoped memory for tpu_custom_call.1']
    #allocation11 [shape = 'u8[32768]{0}', space=vmem, size = 0x8000, scoped, tag = 'input window, operand 3, single buffered']
    #allocation12 [shape = 'u8[32768]{0}', space=vmem, size = 0x8000, scoped, tag = 'input window, operand 4, single buffered']
    #allocation13 [shape = 's32[1]{0}', space=sflag, size = 0x4, scoped, tag = 'scoped memory for tpu_custom_call.1']
    #allocation14 [shape = 'u8[8192]{0}', space=vmem, size = 0x2000, scoped, tag = 'output window, operand 0, single buffered']
    %11 = vsyncpa [#allocation7], 0
    %12 = vsyncpa [#allocation10], 0
    %13 = vsyncpa [#allocation13], 0
    %14 = vsyncpa [#allocation8], 0
    // Predicated region
    $region2: #{tpu_custom_call.1} parent=1 // pred_check
      _
    $region3: #{tpu_custom_call.1} parent=1 // pred_check_branch
      %16 = sbr.rel (0) target = $region5
    $region4: #{tpu_custom_call.1} parent=1 // pred_region
      %s18 = ssub.s32 128, 128
      %19 = vsyncadd [#allocation7], %s18
      %s20 = sshll.u32 [#allocation6], 4
      %s21 = int_to_ptr.vmem [resolvable:$true] %s20
      %26 = dma.hbm_to_vmem [thread:$0]  %s1, 128, %s21, [#allocation7], 64, 64, 4
    $region5: #{tpu_custom_call.1} parent=1 // pred_fallthru
      _
    // Predicated region
    $region6: #{tpu_custom_call.1} parent=1 // pred_check
      _
    $region7: #{tpu_custom_call.1} parent=1 // pred_check_branch
      %28 = sbr.rel (0) target = $region9
    $region8: #{tpu_custom_call.1} parent=1 // pred_region
      %s30 = ssub.s32 1024, 1024
      %31 = vsyncadd [#allocation10], %s30
      %s32 = sshll.u32 [#allocation9], 4
      %s33 = int_to_ptr.vmem [resolvable:$true] %s32
      %38 = dma.hbm_to_vmem [thread:$0]  %s2, 1024, %s33, [#allocation10], 64, 64, 4
    $region9: #{tpu_custom_call.1} parent=1 // pred_fallthru
      _
    // Predicated region
    $region10: #{tpu_custom_call.1} parent=1 // pred_check
      _
    $region11: #{tpu_custom_call.1} parent=1 // pred_check_branch
      %40 = sbr.rel (0) target = $region13
    $region12: #{tpu_custom_call.1} parent=1 // pred_region
      %s42 = ssub.s32 1024, 1024
      %43 = vsyncadd [#allocation10], %s42
      %s44 = sshll.u32 [#allocation11], 4
      %s45 = int_to_ptr.vmem [resolvable:$true] %s44
      %50 = dma.hbm_to_vmem [thread:$0]  %s3, 1024, %s45, [#allocation10], 64, 64, 4
    $region13: #{tpu_custom_call.1} parent=1 // pred_fallthru
      _
    // Predicated region
    $region14: #{tpu_custom_call.1} parent=1 // pred_check
      _
    $region15: #{tpu_custom_call.1} parent=1 // pred_check_branch
      %52 = sbr.rel (0) target = $region17
    $region16: #{tpu_custom_call.1} parent=1 // pred_region
      %s54 = ssub.s32 1024, 1024
      %55 = vsyncadd [#allocation13], %s54
      %s56 = sshll.u32 [#allocation12], 4
      %s57 = int_to_ptr.vmem [resolvable:$true] %s56
      %62 = dma.hbm_to_vmem [thread:$0]  %s4, 1024, %s57, [#allocation13], 64, 64, 4
    $region17: #{tpu_custom_call.1} parent=1 // pred_fallthru
      _
    // Predicated region
    $region18: #{tpu_custom_call.1} parent=1 // pred_check
      _
    $region19: #{tpu_custom_call.1} parent=1 // pred_check_branch
      %64 = sbr.rel (0) target = $region21
    $region20: #{tpu_custom_call.1} parent=1 // pred_region
      %65 = dma.done [#allocation7], 128
    $region21: #{tpu_custom_call.1} parent=1 // pred_fallthru
      _
    // Predicated region
    $region22: #{tpu_custom_call.1} parent=1 // pred_check
      _
    $region23: #{tpu_custom_call.1} parent=1 // pred_check_branch
      %67 = sbr.rel (0) target = $region25
    $region24: #{tpu_custom_call.1} parent=1 // pred_region
      %68 = dma.done [#allocation10], 1024
    $region25: #{tpu_custom_call.1} parent=1 // pred_fallthru
      _
    // Predicated region
    $region26: #{tpu_custom_call.1} parent=1 // pred_check
      _
    $region27: #{tpu_custom_call.1} parent=1 // pred_check_branch
      %70 = sbr.rel (0) target = $region29
    $region28: #{tpu_custom_call.1} parent=1 // pred_region
      %71 = dma.done [#allocation10], 1024
    $region29: #{tpu_custom_call.1} parent=1 // pred_fallthru
      _
    // Predicated region
    $region30: #{tpu_custom_call.1} parent=1 // pred_check
      _
    $region31: #{tpu_custom_call.1} parent=1 // pred_check_branch
      %73 = sbr.rel (0) target = $region33
    $region32: #{tpu_custom_call.1} parent=1 // pred_region
      %74 = dma.done [#allocation13], 1024
    $region33: #{tpu_custom_call.1} parent=1 // pred_fallthru
      _
    %p76 = scmp.eq.s32.totalorder 0, 0
    // Predicated region
    $region34: #{tpu_custom_call.1} parent=1 // pred_check
      %p77 = pneg %p76
    $region35: #{tpu_custom_call.1} parent=1 // pred_check_branch
      %79 = sbr.rel (%p77) target = $region37
    $region36: #{tpu_custom_call.1} parent=1 // pred_region
      %80 = vst [vmem:[#allocation2] sm:$0xff] 0.0
      %81 = vst [vmem:[#allocation2 + $0x8] sm:$0xff] 0.0
      %82 = vst [vmem:[#allocation3] sm:$0xff] 0.0
      %83 = vst [vmem:[#allocation3 + $0x8] sm:$0xff] 0.0
    $region37: #{tpu_custom_call.1} parent=1 // pred_fallthru
      _
    %v84 = vld [vmem:[#allocation6] sm:$0xf]
    %v85 = vld [vmem:[#allocation6 + $0x4] sm:$0xf]
    %v86 = vld [vmem:[#allocation2] sm:$0xff]
    %v87 = vld [vmem:[#allocation2 + $0x8] sm:$0xff]
    %v88 = vld [vmem:[#allocation9] sm:$0xf]
    %v89 = vld [vmem:[#allocation9 + $0x4] sm:$0xf]
    %v90 = vld [vmem:[#allocation9 + $0x8] sm:$0xf]
    %v91 = vld [vmem:[#allocation9 + $0xc] sm:$0xf]
    %v92 = vld [vmem:[#allocation9 + $0x10] sm:$0xf]
    %v93 = vld [vmem:[#allocation9 + $0x14] sm:$0xf]
    %v94 = vld [vmem:[#allocation9 + $0x18] sm:$0xf]
    %v95 = vld [vmem:[#allocation9 + $0x1c] sm:$0xf]
    %v96 = vld [vmem:[#allocation9 + $0x20] sm:$0xf]
    %v97 = vld [vmem:[#allocation9 + $0x24] sm:$0xf]
    %v98 = vld [vmem:[#allocation9 + $0x28] sm:$0xf]
    %v99 = vld [vmem:[#allocation9 + $0x2c] sm:$0xf]
    %v100 = vld [vmem:[#allocation9 + $0x30] sm:$0xf]
    %v101 = vld [vmem:[#allocation9 + $0x34] sm:$0xf]
    %v102 = vld [vmem:[#allocation9 + $0x38] sm:$0xf]
    %v103 = vld [vmem:[#allocation9 + $0x3c] sm:$0xf]
    %v106 = vunpack.c.l.b16 %v84
    %v107 = vunpack.c.l.b16 %v85
    %v108 = vpack.c.b16 %v107, %v106
    %v126 = vunpack.c.l.b16 %v88
    %v127 = vunpack.c.l.b16 %v89
    %v128 = vunpack.c.l.b16 %v90
    %v129 = vunpack.c.l.b16 %v91
    %v130 = vunpack.c.l.b16 %v92
    %v131 = vunpack.c.l.b16 %v93
    %v132 = vunpack.c.l.b16 %v94
    %v133 = vunpack.c.l.b16 %v95
    %v134 = vunpack.c.l.b16 %v96
    %v135 = vunpack.c.l.b16 %v97
    %v136 = vunpack.c.l.b16 %v98
    %v137 = vunpack.c.l.b16 %v99
    %v138 = vunpack.c.l.b16 %v100
    %v139 = vunpack.c.l.b16 %v101
    %v140 = vunpack.c.l.b16 %v102
    %v141 = vunpack.c.l.b16 %v103
    %v142 = vpack.c.b16 %v127, %v126
    %v143 = vpack.c.b16 %v129, %v128
    %v144 = vpack.c.b16 %v131, %v130
    %v145 = vpack.c.b16 %v133, %v132
    %v146 = vpack.c.b16 %v135, %v134
    %v147 = vpack.c.b16 %v137, %v136
    %v148 = vpack.c.b16 %v139, %v138
    %v149 = vpack.c.b16 %v141, %v140
    %158 = vmatprep.subr.bf16.mxu0 0
    %159 = vmatpush1.bf16.msra.mxu0 %v142
    %160 = vmatprep.subr.bf16.mxu0 0
    %161 = vmatpush1.bf16.msra.mxu0 %v143
    %162 = vmatprep.subr.bf16.mxu0 0
    %163 = vmatpush1.bf16.msra.mxu0 %v144
    %164 = vmatprep.subr.bf16.mxu0 0
    %165 = vmatpush1.bf16.msra.mxu0 %v145
    %166 = vmatprep.subr.bf16.mxu0 0
    %167 = vmatpush1.bf16.msra.mxu0 %v146
    %168 = vmatprep.subr.bf16.mxu0 0
    %169 = vmatpush1.bf16.msra.mxu0 %v147
    %170 = vmatprep.subr.bf16.mxu0 0
    %171 = vmatpush1.bf16.msra.mxu0 %v148
    %172 = vmatprep.subr.bf16.mxu0 0
    %173 = vmatpush1.bf16.msra.mxu0 %v149
    %174 = vmatprep.subr.bf16.mxu0 0
    %175 = vmatpush1.bf16.msra.mxu0 0
    %176 = vmatprep.subr.bf16.mxu0 0
    %177 = vmatpush1.bf16.msra.mxu0 0
    %178 = vmatprep.subr.bf16.mxu0 0
    %179 = vmatpush1.bf16.msra.mxu0 0
    %180 = vmatprep.subr.bf16.mxu0 0
    %181 = vmatpush1.bf16.msra.mxu0 0
    %182 = vmatprep.subr.bf16.mxu0 0
    %183 = vmatpush1.bf16.msra.mxu0 0
    %184 = vmatprep.subr.bf16.mxu0 0
    %185 = vmatpush1.bf16.msra.mxu0 0
    %186 = vmatprep.subr.bf16.mxu0 0
    %187 = vmatpush1.bf16.msra.mxu0 0
    %188 = vmatprep.subr.bf16.mxu0 0
    %189 = vmatpush1.bf16.msra.mxu0 0
    %190 = vmatprep.mubr.bf16.mxu0 0
    %191 = vmatmul.mubr.bf16.gmra.mrb[0].mxu0 %v108
    %v192 = vpop.f32.mrb[0].mxu0
    %v193 = vadd.f32 0.0, %v192
    %v194 = vpop.f32.mrb[0].mxu0
    %v195 = vpop.f32.mrb[0].mxu0
    %v196 = vadd.f32 0.0, %v195
    %v197 = vpop.f32.mrb[0].mxu0
    %198 = vdwg.mxu0
    %v199 = vadd.f32 %v86, %v193
    %v200 = vadd.f32 %v87, %v196
    %201 = vst [vmem:[#allocation2] sm:$0xff] %v199
    %202 = vst [vmem:[#allocation2 + $0x8] sm:$0xff] %v200
    %v203 = vld [vmem:[#allocation3] sm:$0xff]
    %v204 = vld [vmem:[#allocation3 + $0x8] sm:$0xff]
    %v205 = vld [vmem:[#allocation11] sm:$0xf]
    %v206 = vld [vmem:[#allocation11 + $0x4] sm:$0xf]
    %v207 = vld [vmem:[#allocation11 + $0x8] sm:$0xf]
    %v208 = vld [vmem:[#allocation11 + $0xc] sm:$0xf]
    %v209 = vld [vmem:[#allocation11 + $0x10] sm:$0xf]
    %v210 = vld [vmem:[#allocation11 + $0x14] sm:$0xf]
    %v211 = vld [vmem:[#allocation11 + $0x18] sm:$0xf]
    %v212 = vld [vmem:[#allocation11 + $0x1c] sm:$0xf]
    %v213 = vld [vmem:[#allocation11 + $0x20] sm:$0xf]
    %v214 = vld [vmem:[#allocation11 + $0x24] sm:$0xf]
    %v215 = vld [vmem:[#allocation11 + $0x28] sm:$0xf]
    %v216 = vld [vmem:[#allocation11 + $0x2c] sm:$0xf]
    %v217 = vld [vmem:[#allocation11 + $0x30] sm:$0xf]
    %v218 = vld [vmem:[#allocation11 + $0x34] sm:$0xf]
    %v219 = vld [vmem:[#allocation11 + $0x38] sm:$0xf]
    %v220 = vld [vmem:[#allocation11 + $0x3c] sm:$0xf]
    %v237 = vunpack.c.l.b16 %v205
    %v238 = vunpack.c.l.b16 %v206
    %v239 = vunpack.c.l.b16 %v207
    %v240 = vunpack.c.l.b16 %v208
    %v241 = vunpack.c.l.b16 %v209
    %v242 = vunpack.c.l.b16 %v210
    %v243 = vunpack.c.l.b16 %v211
    %v244 = vunpack.c.l.b16 %v212
    %v245 = vunpack.c.l.b16 %v213
    %v246 = vunpack.c.l.b16 %v214
    %v247 = vunpack.c.l.b16 %v215
    %v248 = vunpack.c.l.b16 %v216
    %v249 = vunpack.c.l.b16 %v217
    %v250 = vunpack.c.l.b16 %v218
    %v251 = vunpack.c.l.b16 %v219
    %v252 = vunpack.c.l.b16 %v220
    %v253 = vpack.c.b16 %v238, %v237
    %v254 = vpack.c.b16 %v240, %v239
    %v255 = vpack.c.b16 %v242, %v241
    %v256 = vpack.c.b16 %v244, %v243
    %v257 = vpack.c.b16 %v246, %v245
    %v258 = vpack.c.b16 %v248, %v247
    %v259 = vpack.c.b16 %v250, %v249
    %v260 = vpack.c.b16 %v252, %v251
    %269 = vmatprep.subr.bf16.mxu0 0
    %270 = vmatpush1.bf16.msra.mxu0 %v253
    %271 = vmatprep.subr.bf16.mxu0 0
    %272 = vmatpush1.bf16.msra.mxu0 %v254
    %273 = vmatprep.subr.bf16.mxu0 0
    %274 = vmatpush1.bf16.msra.mxu0 %v255
    %275 = vmatprep.subr.bf16.mxu0 0
    %276 = vmatpush1.bf16.msra.mxu0 %v256
    %277 = vmatprep.subr.bf16.mxu0 0
    %278 = vmatpush1.bf16.msra.mxu0 %v257
    %279 = vmatprep.subr.bf16.mxu0 0
    %280 = vmatpush1.bf16.msra.mxu0 %v258
    %281 = vmatprep.subr.bf16.mxu0 0
    %282 = vmatpush1.bf16.msra.mxu0 %v259
    %283 = vmatprep.subr.bf16.mxu0 0
    %284 = vmatpush1.bf16.msra.mxu0 %v260
    %285 = vmatprep.subr.bf16.mxu0 0
    %286 = vmatpush1.bf16.msra.mxu0 0
    %287 = vmatprep.subr.bf16.mxu0 0
    %288 = vmatpush1.bf16.msra.mxu0 0
    %289 = vmatprep.subr.bf16.mxu0 0
    %290 = vmatpush1.bf16.msra.mxu0 0
    %291 = vmatprep.subr.bf16.mxu0 0
    %292 = vmatpush1.bf16.msra.mxu0 0
    %293 = vmatprep.subr.bf16.mxu0 0
    %294 = vmatpush1.bf16.msra.mxu0 0
    %295 = vmatprep.subr.bf16.mxu0 0
    %296 = vmatpush1.bf16.msra.mxu0 0
    %297 = vmatprep.subr.bf16.mxu0 0
    %298 = vmatpush1.bf16.msra.mxu0 0
    %299 = vmatprep.subr.bf16.mxu0 0
    %300 = vmatpush1.bf16.msra.mxu0 0
    %301 = vmatprep.mubr.bf16.mxu0 0
    %302 = vmatmul.mubr.bf16.gmra.mrb[0].mxu0 %v108
    %v303 = vpop.f32.mrb[0].mxu0
    %v304 = vadd.f32 0.0, %v303
    %v305 = vpop.f32.mrb[0].mxu0
    %v306 = vpop.f32.mrb[0].mxu0
    %v307 = vadd.f32 0.0, %v306
    %v308 = vpop.f32.mrb[0].mxu0
    %309 = vdwg.mxu0
    %v310 = vadd.f32 %v203, %v304
    %v311 = vadd.f32 %v204, %v307
    %312 = vst [vmem:[#allocation3] sm:$0xff] %v310
    %313 = vst [vmem:[#allocation3 + $0x8] sm:$0xff] %v311
    // Predicated region
    $region38: #{tpu_custom_call.1} parent=1 // pred_check
      %p314 = pneg %p76
    $region39: #{tpu_custom_call.1} parent=1 // pred_check_branch
      %316 = sbr.rel (%p314) target = $region41
    $region40: #{tpu_custom_call.1} parent=1 // pred_region
      %v317 = vld [vmem:[#allocation2] sm:$0xff]
      %v318 = vld [vmem:[#allocation2 + $0x8] sm:$0xff]
      %v319 = vld [vmem:[#allocation3] sm:$0xff]
      %v320 = vld [vmem:[#allocation3 + $0x8] sm:$0xff]
      %v321 = vpack.c.bf16 %v320, %v319
      %v322 = vld [vmem:[#allocation12] sm:$0xf]
      %v323 = vld [vmem:[#allocation12 + $0x4] sm:$0xf]
      %v324 = vld [vmem:[#allocation12 + $0x8] sm:$0xf]
      %v325 = vld [vmem:[#allocation12 + $0xc] sm:$0xf]
      %v326 = vld [vmem:[#allocation12 + $0x10] sm:$0xf]
      %v327 = vld [vmem:[#allocation12 + $0x14] sm:$0xf]
      %v328 = vld [vmem:[#allocation12 + $0x18] sm:$0xf]
      %v329 = vld [vmem:[#allocation12 + $0x1c] sm:$0xf]
      %v330 = vld [vmem:[#allocation12 + $0x20] sm:$0xf]
      %v331 = vld [vmem:[#allocation12 + $0x24] sm:$0xf]
      %v332 = vld [vmem:[#allocation12 + $0x28] sm:$0xf]
      %v333 = vld [vmem:[#allocation12 + $0x2c] sm:$0xf]
      %v334 = vld [vmem:[#allocation12 + $0x30] sm:$0xf]
      %v335 = vld [vmem:[#allocation12 + $0x34] sm:$0xf]
      %v336 = vld [vmem:[#allocation12 + $0x38] sm:$0xf]
      %v337 = vld [vmem:[#allocation12 + $0x3c] sm:$0xf]
      %v354 = vunpack.c.l.b16 %v322
      %v355 = vunpack.c.l.b16 %v323
      %v356 = vunpack.c.l.b16 %v324
      %v357 = vunpack.c.l.b16 %v325
      %v358 = vunpack.c.l.b16 %v326
      %v359 = vunpack.c.l.b16 %v327
      %v360 = vunpack.c.l.b16 %v328
      %v361 = vunpack.c.l.b16 %v329
      %v362 = vunpack.c.l.b16 %v330
      %v363 = vunpack.c.l.b16 %v331
      %v364 = vunpack.c.l.b16 %v332
      %v365 = vunpack.c.l.b16 %v333
      %v366 = vunpack.c.l.b16 %v334
      %v367 = vunpack.c.l.b16 %v335
      %v368 = vunpack.c.l.b16 %v336
      %v369 = vunpack.c.l.b16 %v337
      %v370 = vpack.c.b16 %v355, %v354
      %v371 = vpack.c.b16 %v357, %v356
      %v372 = vpack.c.b16 %v359, %v358
      %v373 = vpack.c.b16 %v361, %v360
      %v374 = vpack.c.b16 %v363, %v362
      %v375 = vpack.c.b16 %v365, %v364
      %v376 = vpack.c.b16 %v367, %v366
      %v377 = vpack.c.b16 %v369, %v368
      %386 = vmatprep.subr.bf16.mxu0 0
      %387 = vmatpush1.bf16.msra.mxu0 %v370
      %388 = vmatprep.subr.bf16.mxu0 0
      %389 = vmatpush1.bf16.msra.mxu0 %v371
      %390 = vmatprep.subr.bf16.mxu0 0
      %391 = vmatpush1.bf16.msra.mxu0 %v372
      %392 = vmatprep.subr.bf16.mxu0 0
      %393 = vmatpush1.bf16.msra.mxu0 %v373
      %394 = vmatprep.subr.bf16.mxu0 0
      %395 = vmatpush1.bf16.msra.mxu0 %v374
      %396 = vmatprep.subr.bf16.mxu0 0
      %397 = vmatpush1.bf16.msra.mxu0 %v375
      %398 = vmatprep.subr.bf16.mxu0 0
      %399 = vmatpush1.bf16.msra.mxu0 %v376
      %400 = vmatprep.subr.bf16.mxu0 0
      %401 = vmatpush1.bf16.msra.mxu0 %v377
      %402 = vmatprep.subr.bf16.mxu0 0
      %403 = vmatpush1.bf16.msra.mxu0 0
      %404 = vmatprep.subr.bf16.mxu0 0
      %405 = vmatpush1.bf16.msra.mxu0 0
      %406 = vmatprep.subr.bf16.mxu0 0
      %407 = vmatpush1.bf16.msra.mxu0 0
      %408 = vmatprep.subr.bf16.mxu0 0
      %409 = vmatpush1.bf16.msra.mxu0 0
      %410 = vmatprep.subr.bf16.mxu0 0
      %411 = vmatpush1.bf16.msra.mxu0 0
      %412 = vmatprep.subr.bf16.mxu0 0
      %413 = vmatpush1.bf16.msra.mxu0 0
      %414 = vmatprep.subr.bf16.mxu0 0
      %415 = vmatpush1.bf16.msra.mxu0 0
      %416 = vmatprep.subr.bf16.mxu0 0
      %417 = vmatpush1.bf16.msra.mxu0 0
      %418 = vmatprep.mubr.bf16.mxu0 0
      %419 = vmatmul.mubr.bf16.gmra.mrb[0].mxu0 %v321
      %v420 = vpop.f32.mrb[0].mxu0
      %v421 = vadd.f32 0.0, %v420
      %v422 = vpop.f32.mrb[0].mxu0
      %v423 = vpop.f32.mrb[0].mxu0
      %v424 = vadd.f32 0.0, %v423
      %v425 = vpop.f32.mrb[0].mxu0
      %426 = vdwg.mxu0
      %v427 = vadd.f32 %v317, %v421
      %v428 = vadd.f32 %v318, %v424
      %429 = vst [vmem:[#allocation14] sm:$0xff] %v427
      %430 = vst [vmem:[#allocation14 + $0x8] sm:$0xff] %v428
    $region41: #{tpu_custom_call.1} parent=1 // pred_fallthru
      _
    // Predicated region
    $region42: #{tpu_custom_call.1} parent=1 // pred_check
      _
    $region43: #{tpu_custom_call.1} parent=1 // pred_check_branch
      %432 = sbr.rel (0) target = $region45
    $region44: #{tpu_custom_call.1} parent=1 // pred_region
      %s434 = ssub.s32 256, 256
      %435 = vsyncadd [#allocation8], %s434
      %s436 = sshll.u32 [#allocation14], 4
      %s437 = int_to_ptr.vmem [resolvable:$true] %s436
      %442 = dma.vmem_to_hbm [thread:$0]  %s437, 256, %s5, [#allocation8], 128, 128, 8
    $region45: #{tpu_custom_call.1} parent=1 // pred_fallthru
      _
    // Predicated region
    $region46: #{tpu_custom_call.1} parent=1 // pred_check
      _
    $region47: #{tpu_custom_call.1} parent=1 // pred_check_branch
      %444 = sbr.rel (0) target = $region49
    $region48: #{tpu_custom_call.1} parent=1 // pred_region
      %445 = dma.done [#allocation8], 256
    $region49: #{tpu_custom_call.1} parent=1 // pred_fallthru
      _
    %446 = vsyncpa [#allocation7], 1
    %447 = vsyncpa [#allocation10], 1
    %448 = vsyncpa [#allocation13], 1
    %449 = vsyncpa [#allocation8], 1

</llo_original>
